<compile_context>
chip_gen: v7x
topology: tpu7x:2x2x1
jax: 0.10.0
libtpu: 0.0.40
codegen_flags: <defaults>
</compile_context>

<pallas_src>
import functools

import jax
import jax.numpy as jnp
import numpy as np
from jax import lax
from jax.experimental import pallas as pl
from jax.experimental.pallas import tpu as pltpu


# ----------------------------------------------------------------------------
# Pallas kernel: broadcast complex multiply of the rFFT spectra (bins [0, T))
# ----------------------------------------------------------------------------
def _spectral_mul_kernel(x_ref, d_ref, o_ref):
    """One (freq-tile, batch) grid step.

    x_ref : (1, 2, ft)      signal-spectrum planes for one batch elem  [real, imag]
    d_ref : (2, nd, ft)     decay-bank spectrum planes                  [real, imag]
    o_ref : (1, 2, nd, ft)  product-spectrum planes                     [real, imag]
    """
    xr = x_ref[0, 0:1, :]            # (1, ft)  broadcasts along sublanes
    xi = x_ref[0, 1:2, :]
    dr = d_ref[0]                    # (nd, ft) full-plane loads (no sub-tile slicing)
    di = d_ref[1]
    o_ref[0, 0] = xr * dr - xi * di
    o_ref[0, 1] = xr * di + xi * dr


def _choose_tile(T, nd, *, max_lanes=32768, vmem_budget_bytes=16 << 20):
    """Lane-tile ft (multiple of 128 dividing T), sized from n_decays and a VMEM
    budget that fits v5e's 16 MiB default scoped VMEM up to v7x's 64 MiB physical."""
    assert T % 128 == 0, "n_samples must be a multiple of 128"
    r = -(-nd // 8) * 8                          # sublane-padded decay rows per plane
    bytes_per_lane = 2 * (8 + 4 * r) * 4         # double-buffered x + d + out blocks
    cap = max(512, (vmem_budget_bytes // bytes_per_lane) // 128 * 128)
    cap = min(cap, max_lanes)
    ft = T
    while ft > cap and ft % 256 == 0:            # keep ft a 128-multiple divisor of T
        ft //= 2
    return ft, T // ft


def _spectral_mul(x_planes, d_planes, *, max_lanes=32768):
    """x_planes: (B, 2, T) f32, d_planes: (2, nd, T) f32 -> (B, 2, nd, T) f32."""
    B, _, T = x_planes.shape
    _, nd, Td = d_planes.shape
    assert Td == T
    ft, n_tiles = _choose_tile(T, nd, max_lanes=max_lanes)

    # Frequency OUTER, batch INNER: decay-spectrum block index is constant across
    # consecutive (inner) steps -> Pallas skips its re-DMA.  Outer axis "parallel"
    # for megacore split; inner "arbitrary" preserves the reuse within each core.
    x_spec = pl.BlockSpec((1, 2, ft), lambda f, b: (b, 0, f))
    d_spec = pl.BlockSpec((2, nd, ft), lambda f, b: (0, 0, f))
    o_spec = pl.BlockSpec((1, 2, nd, ft), lambda f, b: (b, 0, 0, f))

    return pl.pallas_call(
        _spectral_mul_kernel,
        out_shape=jax.ShapeDtypeStruct((B, 2, nd, T), jnp.float32),
        grid_spec=pltpu.PrefetchScalarGridSpec(
            num_scalar_prefetch=0,
            grid=(n_tiles, B),
            in_specs=[x_spec, d_spec],
            out_specs=o_spec,
        ),
        compiler_params=pltpu.CompilerParams(
            dimension_semantics=("parallel", "arbitrary"),
            vmem_limit_bytes=32 << 20),
    )(x_planes, d_planes)


# ----------------------------------------------------------------------------
# fft_convolve (the forward pass) and helpers
# ----------------------------------------------------------------------------
def unit_norm(x, axis=-1, epsilon=1e-8):
    n = jnp.linalg.norm(x, axis=axis, keepdims=True)
    return x / (n + epsilon)


def _decay_spectra(d, T):
    """d: (nd, T) f32 -> packed main-bin planes (2, nd, T) f32 + Nyquist bin (nd, 1) c64."""
    ds = jnp.fft.rfft(d, n=2 * T, axis=-1)                          # (nd, T+1)
    d_planes = jnp.stack([jnp.real(ds[:, :T]), jnp.imag(ds[:, :T])], axis=0)
    return d_planes, ds[:, T:]


def _fft_convolve_planes(x, d_planes, d_nyq, *, max_lanes=32768):
    """x: (B, 1, T); d_planes: (2, nd, T); d_nyq: (nd, 1) -> (B, nd, T)."""
    B, cx, T = x.shape
    assert cx == 1, x.shape
    nd = d_planes.shape[1]
    n_fft = 2 * T

    # TODO(synk): rfft / irfft have no Pallas TPU primitive; the transforms stay in XLA.
    xs = jnp.fft.rfft(x[:, 0, :], n=n_fft, axis=-1)                 # (B, T+1), pads internally
    x_planes = jnp.stack([jnp.real(xs[:, :T]), jnp.imag(xs[:, :T])], axis=1)   # (B, 2, T)

    out = _spectral_mul(x_planes, d_planes, max_lanes=max_lanes)    # (B, 2, nd, T)  Pallas

    spec_main = lax.complex(out[:, 0], out[:, 1])                   # (B, nd, T)
    spec_nyq = xs[:, None, T:] * d_nyq[None, :, :]                  # (B, nd, 1) Nyquist bin
    spec = jnp.concatenate([spec_main, spec_nyq], axis=-1)          # (B, nd, T+1)
    y = jnp.fft.irfft(spec, n=n_fft, axis=-1)                       # (B, nd, 2T)
    return y[..., :T]


def fft_convolve(x, d):
    """x: (B, 1, T), d: (1, n_decays, T) -> (B, n_decays, T) causal convolution."""
    B, cx, T = x.shape
    _, nd, Td = d.shape
    assert cx == 1 and Td == T, (x.shape, d.shape)
    d_planes, d_nyq = _decay_spectra(d[0], T)
    return _fft_convolve_planes(x, d_planes, d_nyq)


# ----------------------------------------------------------------------------
# The module
# ----------------------------------------------------------------------------
class DecayLoss:
    def __init__(self, n_samples, n_decays, min_decay, max_decay, *, key):
        self.n_samples = n_samples
        self.n_decays = n_decays
        self.min_decay = min_decay
        self.max_decay = max_decay
        # One-time buffer construction (not the hot path) — plain JAX.
        base = jnp.linspace(1.0, 0.0, n_samples, dtype=jnp.float32)[None, :]
        exps = jnp.linspace(min_decay, max_decay, n_decays, dtype=jnp.float32)[:, None]
        decays = (base ** exps)[None, :, :]                          # (1, nd, T)
        noise = jax.random.uniform(key, (1, 1, n_samples),
                                   minval=-1.0, maxval=1.0, dtype=jnp.float32)
        self.decays = unit_norm(decays * noise)                      # (1, nd, T)
        # Hoist the constant decay-bank spectrum out of the hot path (perf review).
        self.d_planes, self.d_nyq = _decay_spectra(self.decays[0], n_samples)

    def __call__(self, x):
        return _fft_convolve_planes(x, self.d_planes, self.d_nyq)

    def compute_loss(self, x, y):
        return jnp.abs(self(x) - self(y)).sum()


# ----------------------------------------------------------------------------
# References for correctness checking
# ----------------------------------------------------------------------------
def _reference_fft(x, decays):
    """Same FFT path, spectra multiplied in plain jnp (isolates the Pallas kernel)."""
    B, _, T = x.shape
    xs = jnp.fft.rfft(jnp.pad(x[:, 0, :], ((0, 0), (0, T))), axis=-1)
    ds = jnp.fft.rfft(jnp.pad(decays[0], ((0, 0), (0, T))), axis=-1)
    spec = xs[:, None, :] * ds[None, :, :]
    return jnp.fft.irfft(spec, n=2 * T, axis=-1)[..., :T]


def _reference_direct(x, decays):
    """Direct causal convolution (== fft_convolve with 2x zero padding)."""
    xn = np.asarray(x)[:, 0, :].astype(np.float64)
    dn = np.asarray(decays)[0].astype(np.float64)
    B, T = xn.shape
    nd = dn.shape[0]
    out = np.zeros((B, nd, T), np.float64)
    for b in range(B):
        for j in range(nd):
            out[b, j] = np.convolve(xn[b], dn[j])[:T]
    return out


# ----------------------------------------------------------------------------
if __name__ == "__main__":
    # Small shapes consistent with the module: (batch, channels=1, n_samples).
    batch, n_samples, n_decays = 2, 2048, 4
    min_decay, max_decay = 2.0, 32.0

    key = jax.random.PRNGKey(0)
    k_noise, k_x = jax.random.split(key)

    model = DecayLoss(n_samples, n_decays, min_decay, max_decay, key=k_noise)
    x = jax.random.normal(k_x, (batch, 1, n_samples), dtype=jnp.float32)

    fwd = jax.jit(model.__call__)
    out = jax.block_until_ready(fwd(x))
    assert out.shape == (batch, n_decays, n_samples), out.shape

    # Check the Pallas spectral multiply against the plain-jnp FFT path.
    ref_fft = np.asarray(_reference_fft(x, model.decays))
    assert np.allclose(np.asarray(out), ref_fft, atol=1e-3, rtol=1e-3)

    # Check full fft_convolve semantics against a float64 direct convolution.
    ref_direct = _reference_direct(x, model.decays)
    assert np.allclose(np.asarray(out), ref_direct, atol=5e-3)

    # Multi-tile frequency path (force 512-lane tiles -> 4 grid steps along freq).
    fwd_mt = jax.jit(functools.partial(_fft_convolve_planes,
                                       d_planes=model.d_planes,
                                       d_nyq=model.d_nyq,
                                       max_lanes=512))
    out_mt = jax.block_until_ready(fwd_mt(x))
    assert out_mt.shape == (batch, n_decays, n_samples), out_mt.shape
    assert np.allclose(np.asarray(out_mt), ref_fft, atol=1e-3, rtol=1e-3)

    print("KERNEL_OK")
</pallas_src>

<mosaic_0001>
module attributes {stable_mosaic.version = 11 : i64} {
  func.func @_spectral_mul_kernel(%arg0: i32, %arg1: i32, %arg2: memref<1x2x2048xf32, #tpu.memory_space<vmem>>, %arg3: memref<2x4x2048xf32, #tpu.memory_space<vmem>>, %arg4: memref<1x2x4x2048xf32, #tpu.memory_space<vmem>>) attributes {dimension_semantics = [#tpu.dimension_semantics<parallel>, #tpu.dimension_semantics<arbitrary>], iteration_bounds = array<i64: 1, 2>, scalar_prefetch = 0 : i64, scratch_operands = 0 : i64, tpu.core_type = #tpu.core_type<tc>, window_params = [{transform_indices = @transform_0, window_bounds = array<i64: 1, 2, 2048>}, {transform_indices = @transform_1, window_bounds = array<i64: 2, 4, 2048>}, {transform_indices = @transform_2, window_bounds = array<i64: 1, 2, 4, 2048>}]} {
    %c0 = arith.constant 0 : index
    %c0_0 = arith.constant 0 : index
    %c0_1 = arith.constant 0 : index
    %0 = vector.load %arg2[%c0, %c0_0, %c0_1] : memref<1x2x2048xf32, #tpu.memory_space<vmem>>, vector<1x1x2048xf32>
    %1 = vector.shape_cast %0 : vector<1x1x2048xf32> to vector<1x2048xf32>
    %c0_2 = arith.constant 0 : index
    %c1 = arith.constant 1 : index
    %c0_3 = arith.constant 0 : index
    %2 = vector.load %arg2[%c0_2, %c1, %c0_3] : memref<1x2x2048xf32, #tpu.memory_space<vmem>>, vector<1x1x2048xf32>
    %3 = vector.shape_cast %2 : vector<1x1x2048xf32> to vector<1x2048xf32>
    %c0_4 = arith.constant 0 : index
    %c0_5 = arith.constant 0 : index
    %c0_6 = arith.constant 0 : index
    %4 = vector.load %arg3[%c0_4, %c0_5, %c0_6] : memref<2x4x2048xf32, #tpu.memory_space<vmem>>, vector<1x4x2048xf32>
    %5 = vector.shape_cast %4 : vector<1x4x2048xf32> to vector<4x2048xf32>
    %c1_7 = arith.constant 1 : index
    %c0_8 = arith.constant 0 : index
    %c0_9 = arith.constant 0 : index
    %6 = vector.load %arg3[%c1_7, %c0_8, %c0_9] : memref<2x4x2048xf32, #tpu.memory_space<vmem>>, vector<1x4x2048xf32>
    %7 = vector.shape_cast %6 : vector<1x4x2048xf32> to vector<4x2048xf32>
    %8 = vector.broadcast %1 : vector<1x2048xf32> to vector<4x2048xf32>
    %9 = arith.mulf %8, %5 : vector<4x2048xf32>
    %10 = vector.broadcast %3 : vector<1x2048xf32> to vector<4x2048xf32>
    %11 = arith.mulf %10, %7 : vector<4x2048xf32>
    %12 = arith.subf %9, %11 : vector<4x2048xf32>
    %c0_10 = arith.constant 0 : index
    %c0_11 = arith.constant 0 : index
    %c0_12 = arith.constant 0 : index
    %c0_13 = arith.constant 0 : index
    %13 = vector.load %arg4[%c0_10, %c0_11, %c0_12, %c0_13] : memref<1x2x4x2048xf32, #tpu.memory_space<vmem>>, vector<1x1x4x2048xf32>
    %14 = vector.shape_cast %13 : vector<1x1x4x2048xf32> to vector<4x2048xf32>
    %15 = vector.shape_cast %12 : vector<4x2048xf32> to vector<1x1x4x2048xf32>
    tpu.vector_store %arg4[%c0_10, %c0_11, %c0_12, %c0_13], %15 {strides = array<i32>} : memref<1x2x4x2048xf32, #tpu.memory_space<vmem>>, vector<1x1x4x2048xf32>,
    %16 = vector.broadcast %1 : vector<1x2048xf32> to vector<4x2048xf32>
    %17 = arith.mulf %16, %7 : vector<4x2048xf32>
    %18 = vector.broadcast %3 : vector<1x2048xf32> to vector<4x2048xf32>
    %19 = arith.mulf %18, %5 : vector<4x2048xf32>
    %20 = arith.addf %17, %19 : vector<4x2048xf32>
    %c0_14 = arith.constant 0 : index
    %c1_15 = arith.constant 1 : index
    %c0_16 = arith.constant 0 : index
    %c0_17 = arith.constant 0 : index
    %21 = vector.load %arg4[%c0_14, %c1_15, %c0_16, %c0_17] : memref<1x2x4x2048xf32, #tpu.memory_space<vmem>>, vector<1x1x4x2048xf32>
    %22 = vector.shape_cast %21 : vector<1x1x4x2048xf32> to vector<4x2048xf32>
    %23 = vector.shape_cast %20 : vector<4x2048xf32> to vector<1x1x4x2048xf32>
    tpu.vector_store %arg4[%c0_14, %c1_15, %c0_16, %c0_17], %23 {strides = array<i32>} : memref<1x2x4x2048xf32, #tpu.memory_space<vmem>>, vector<1x1x4x2048xf32>,
    return
  }
  func.func @transform_0(%arg0: i32, %arg1: i32) -> (i32, i32, i32) {
    %c0_i32 = arith.constant 0 : i32
    %c0_i32_0 = arith.constant 0 : i32
    return %arg1, %c0_i32, %arg0 : i32, i32, i32
  }
  func.func @transform_1(%arg0: i32, %arg1: i32) -> (i32, i32, i32) {
    %c0_i32 = arith.constant 0 : i32
    %c0_i32_0 = arith.constant 0 : i32
    %c0_i32_1 = arith.constant 0 : i32
    return %c0_i32, %c0_i32_0, %arg0 : i32, i32, i32
  }
  func.func @transform_2(%arg0: i32, %arg1: i32) -> (i32, i32, i32, i32) {
    %c0_i32 = arith.constant 0 : i32
    %c0_i32_0 = arith.constant 0 : i32
    %c0_i32_1 = arith.constant 0 : i32
    return %arg1, %c0_i32, %c0_i32_0, %arg0 : i32, i32, i32, i32
  }
}

</mosaic_0001>

<llo_original>
// kernel: reverse.3
$region0: #{reverse.3}
  %s0 = inlined_call_operand.vmem [shape: f32[2,4,2048], index: 0, kind: input, shape index: {}]
  %s1 = inlined_call_operand.vmem [shape: f32[2,4,2048], index: 1, kind: output, shape index: {}]
  %v2 = vlaneseq
  %v3 = vsub.s32 127, %v2
  %4 = vset.pattern.permute.xlu0 %v3
  $region1: #{reverse.3} parent=0
    #allocation0 [shape = 'u8[8192]{0}', space=vmem, size = 0x2000, scoped, tag = 'operand span for operand 0']
    #allocation1 [shape = 'u8[8192]{0}', space=vmem, size = 0x2000, scoped, tag = 'packed  for operand 0']
    #allocation2 [shape = 'u8[8192]{0}', space=vmem, size = 0x2000, scoped, tag = 'operand span for operand 1']
    #allocation3 [shape = 'u8[8192]{0}', space=vmem, size = 0x2000, scoped, tag = 'packed  for operand 1']
    loop: start=0, step=1, limit=18
    $region2: #{reverse.3} parent=1 // loop_pre_header
      _
    $region3: #{reverse.3} parent=1 // loop_header
      %s6 = sphi 0, %s10
      %p7 = scmp.ge.s32.totalorder %s6, 18
      %s13 = sphi 0, %s32
      %s14 = sphi 0, %s28
      %s15 = sphi 0, %s24
      %s16 = sphi 0, %s13
      %s17 = sphi 0, %s14
      %s18 = sphi 0, %s15
      %s19 = sphi 0, %s16
      %s20 = sphi 0, %s17
      %s21 = sphi 0, %s18
    $region4: #{reverse.3} parent=1 // loop_header_branch
      %9 = sbr.rel (%p7) target = $region8
    $region5: #{reverse.3} parent=1 // loop_body
      %s11 = ssub.s32 %s6, 1
      %s12 = ssub.s32 %s6, 2
      %s22 = sadd.s32 1, %s15
      %p23 = scmp.ge.s32.totalorder %s22, 16
      %s24 = scalar_select %p23, 0, %s22
      %s25 = sadd.s32 1, %s14
      %s26 = scalar_select %p23, %s25, %s14
      %p27 = scmp.ge.s32.totalorder %s26, 1
      %s28 = scalar_select %p27, 0, %s26
      %s29 = sadd.s32 1, %s13
      %s30 = scalar_select %p27, %s29, %s13
      %p31 = scmp.ge.s32.totalorder %s30, 1
      %s32 = scalar_select %p31, 0, %s30
      %p33 = scmp.le.s32.totalorder 1, %s6
      %p34 = scmp.lt.s32.totalorder %s6, 17
      %p35 = pnand %p33, %p34
      %p36 = pneg %p35
      // Predicated region
      $region9: #{reverse.3} parent=5 // pred_check
        _
      $region10: #{reverse.3} parent=5 // pred_check_branch
        %38 = sbr.rel (%p35) target = $region12
      $region11: #{reverse.3} parent=5 // pred_region
        %s39 = ssub.s32 %s6, 1
      $region12: #{reverse.3} parent=5 // pred_fallthru
        _
      %p40 = scmp.lt.s32.totalorder %s6, 16
      // Predicated region
      $region13: #{reverse.3} parent=5 // pred_check
        %p41 = pneg %p40
      $region14: #{reverse.3} parent=5 // pred_check_branch
        %43 = sbr.rel (%p41) target = $region16
      $region15: #{reverse.3} parent=5 // pred_region
        %s44 = sand.u32 %s6, 1
        %s45 = sand.u32 %s6, 1
        %s46 = smul.addr %s45, 8
        %s47 = scalar_lea.vmem [#allocation1], %s46
        %s48 = ssub.s32 15, %s15
        %s49 = smul.u32 2, %s13
        %s50 = smul.addr %s14, 16
        %s51 = sadd.s32 %s48, %s50
        %s52 = smul.addr %s49, 16
        %s53 = sadd.s32 %s51, %s52
        %s54 = smul.addr %s53, 4
        %s55 = scalar_lea.vmem %s0, %s54
        // Predicated region
        $region17: #{reverse.3} parent=15 // pred_check
          _
        $region18: #{reverse.3} parent=15 // pred_check_branch
          %57 = sbr.rel (0) target = $region20
        $region19: #{reverse.3} parent=15 // pred_region
          // Predicated region
          $region21: #{reverse.3} parent=19 // pred_check
            _
          $region22: #{reverse.3} parent=19 // pred_check_branch
            %59 = sbr.rel target = $region24
          $region23: #{reverse.3} parent=19 // pred_region
            // Predicated region
            $region36: #{reverse.3} parent=23 // pred_check
              _
            $region37: #{reverse.3} parent=23 // pred_check_branch
              %76 = sbr.rel (0) target = $region39
            $region38: #{reverse.3} parent=23 // pred_region
              loop: start=0, step=1, limit=1
              $region40: #{reverse.3} parent=38 // loop_pre_header
                _
              $region41: #{reverse.3} parent=38 // loop_header
                %s78 = sphi 0, %s82
                %p79 = scmp.ge.s32.totalorder %s78, 1
                %s83 = sphi %s55, %s55
                %s84 = sphi %s47, %s47
              $region42: #{reverse.3} parent=38 // loop_header_branch
                %81 = sbr.rel (%p79) target = $region46
              $region43: #{reverse.3} parent=38 // loop_body
                _
              $region44: #{reverse.3} parent=38 // loop_footer
                %s82 = sadd.s32 1, %s78
              $region45: #{reverse.3} parent=38 // loop_footer_branch
                %77 = sbr.rel target = $region41
              $region46: #{reverse.3} parent=38 // loop_exit
                _
              loop: start=0, step=1, limit=1
              $region47: #{reverse.3} parent=38 // loop_pre_header
                _
              $region48: #{reverse.3} parent=38 // loop_header
                %s87 = sphi 0, %s91
                %p88 = scmp.ge.s32.totalorder %s87, 1
                %s92 = sphi %s55, %s55
                %s93 = sphi %s47, %s47
              $region49: #{reverse.3} parent=38 // loop_header_branch
                %90 = sbr.rel (%p88) target = $region53
              $region50: #{reverse.3} parent=38 // loop_body
                %v94 = vld [vmem:[%s92] sm:$0xf]
                %95 = vst [vmem:[%s93] sm:$0xf] %v94
                %v96 = vld [vmem:[%s92 + $0x40] sm:$0xf]
                %97 = vst [vmem:[%s93 + $0x4] sm:$0xf] %v96
              $region51: #{reverse.3} parent=38 // loop_footer
                %s91 = sadd.s32 1, %s87
              $region52: #{reverse.3} parent=38 // loop_footer_branch
                %86 = sbr.rel target = $region48
              $region53: #{reverse.3} parent=38 // loop_exit
                _
            $region39: #{reverse.3} parent=23 // pred_fallthru
              _
          $region24: #{reverse.3} parent=19 // pred_fallthru
            _
          // Predicated region
          $region25: #{reverse.3} parent=19 // pred_check
            _
          $region26: #{reverse.3} parent=19 // pred_check_branch
            %61 = sbr.rel (0) target = $region28
          $region27: #{reverse.3} parent=19 // pred_region
            loop: start=0, step=1, limit=1
            $region29: #{reverse.3} parent=27 // loop_pre_header
              _
            $region30: #{reverse.3} parent=27 // loop_header
              %s64 = sphi 0, %s68
              %p65 = scmp.ge.s32.totalorder %s64, 1
              %s69 = sphi %s55, %s55
              %s70 = sphi %s47, %s47
            $region31: #{reverse.3} parent=27 // loop_header_branch
              %67 = sbr.rel (%p65) target = $region35
            $region32: #{reverse.3} parent=27 // loop_body
              %v71 = vld [vmem:[%s69] sm:$0xf]
              %72 = vst [vmem:[%s70] sm:$0xf] %v71
              %v73 = vld [vmem:[%s69 + $0x40] sm:$0xf]
              %74 = vst [vmem:[%s70 + $0x4] sm:$0xf] %v73
            $region33: #{reverse.3} parent=27 // loop_footer
              %s68 = sadd.s32 1, %s64
            $region34: #{reverse.3} parent=27 // loop_footer_branch
              %63 = sbr.rel target = $region30
            $region35: #{reverse.3} parent=27 // loop_exit
              _
          $region28: #{reverse.3} parent=19 // pred_fallthru
            _
        $region20: #{reverse.3} parent=15 // pred_fallthru
          _
        %98 = vnop
      $region16: #{reverse.3} parent=5 // pred_fallthru
        _
      %p99 = scmp.le.s32.totalorder 1, %s6
      %p100 = scmp.lt.s32.totalorder %s6, 17
      %p101 = pnand %p99, %p100
      %p102 = pneg %p101
      // Predicated region
      $region54: #{reverse.3} parent=5 // pred_check
        _
      $region55: #{reverse.3} parent=5 // pred_check_branch
        %104 = sbr.rel (%p101) target = $region57
      $region56: #{reverse.3} parent=5 // pred_region
        %s105 = ssub.s32 %s6, 1
        %s106 = sand.u32 %s11, 1
        %s107 = sand.u32 %s11, 1
        %s108 = smul.addr %s107, 8
        %s109 = scalar_lea.vmem [#allocation1], %s108
        %s110 = sand.u32 %s11, 1
        %s111 = sand.u32 %s11, 1
        %s112 = smul.addr %s111, 8
        %s113 = scalar_lea.vmem [#allocation1], %s112
        %s114 = sand.u32 %s11, 1
        %s115 = sand.u32 %s11, 1
        %s116 = smul.addr %s115, 8
        %s117 = scalar_lea.vmem [#allocation3], %s116
        %s119 = sshllo.u32 0, 4
        %s120 = scalar_lea.vmem %s113, 4 [#allocation1]
        %v121 = vld [vmem:[%s120] sm:%s119]
        %s122 = scalar_lea.vmem [#allocation0], 8
        %123 = vst [vmem:[%s122] sm:%s119] %v121
        %v124 = vld [vmem:[%s113] sm:%s119]
        %125 = vst [vmem:[#allocation0] sm:%s119] %v124
        %s126 = ssub.s32 15, %s18
        %s127 = smul.u32 2, %s16
        %s128 = smul.u32 2, %s16
        %v129 = vld [vmem:[#allocation0] sm:$0xff]
        %130 = vperm.xlu0 %4, %v129
        %v131 = vpop.permute.xlu0 %130
        %132 = vst [vmem:[#allocation2] sm:$0xff] %v131
        %s133 = scalar_lea.vmem [#allocation2], 8
        %s134 = scalar_lea.vmem [#allocation0], 8
        %v135 = vld [vmem:[%s134] sm:$0xff]
        %136 = vperm.xlu0 %4, %v135
        %v137 = vpop.permute.xlu0 %136
        %138 = vst [vmem:[%s133] sm:$0xff] %v137
        %s140 = sshllo.u32 0, 4
        %v142 = vld [vmem:[#allocation2] sm:%s140]
        %s143 = sshllo.u32 0, 4
        %144 = vst [vmem:[%s117] sm:%s143] %v142
        %s145 = scalar_lea.vmem [#allocation2], 8
        %v146 = vld [vmem:[%s145] sm:%s140]
        %s147 = sshllo.u32 0, 4
        %s148 = scalar_lea.vmem %s117, 4 [#allocation3]
        %149 = vst [vmem:[%s148] sm:%s147] %v146
        %s150 = sand.u32 %s11, 1
        %s151 = sand.u32 %s11, 1
        %s152 = smul.addr %s151, 8
        %s153 = scalar_lea.vmem [#allocation3], %s152
        %s154 = smul.u32 2, %s16
        %s155 = smul.addr %s17, 16
        %s156 = sadd.s32 %s18, %s155
        %s157 = smul.addr %s154, 16
        %s158 = sadd.s32 %s156, %s157
        %s159 = smul.addr %s158, 4
        %s160 = scalar_lea.vmem %s1, %s159
        // Predicated region
        $region58: #{reverse.3} parent=56 // pred_check
          _
        $region59: #{reverse.3} parent=56 // pred_check_branch
          %162 = sbr.rel (0) target = $region61
        $region60: #{reverse.3} parent=56 // pred_region
          // Predicated region
          $region62: #{reverse.3} parent=60 // pred_check
            _
          $region63: #{reverse.3} parent=60 // pred_check_branch
            %164 = sbr.rel target = $region65
          $region64: #{reverse.3} parent=60 // pred_region
            // Predicated region
            $region77: #{reverse.3} parent=64 // pred_check
              _
            $region78: #{reverse.3} parent=64 // pred_check_branch
              %181 = sbr.rel (0) target = $region80
            $region79: #{reverse.3} parent=64 // pred_region
              loop: start=0, step=1, limit=1
              $region81: #{reverse.3} parent=79 // loop_pre_header
                _
              $region82: #{reverse.3} parent=79 // loop_header
                %s183 = sphi 0, %s187
                %p184 = scmp.ge.s32.totalorder %s183, 1
                %s188 = sphi %s153, %s153
                %s189 = sphi %s160, %s160
              $region83: #{reverse.3} parent=79 // loop_header_branch
                %186 = sbr.rel (%p184) target = $region87
              $region84: #{reverse.3} parent=79 // loop_body
                _
              $region85: #{reverse.3} parent=79 // loop_footer
                %s187 = sadd.s32 1, %s183
              $region86: #{reverse.3} parent=79 // loop_footer_branch
                %182 = sbr.rel target = $region82
              $region87: #{reverse.3} parent=79 // loop_exit
                _
              loop: start=0, step=1, limit=1
              $region88: #{reverse.3} parent=79 // loop_pre_header
                _
              $region89: #{reverse.3} parent=79 // loop_header
                %s192 = sphi 0, %s196
                %p193 = scmp.ge.s32.totalorder %s192, 1
                %s197 = sphi %s153, %s153
                %s198 = sphi %s160, %s160
              $region90: #{reverse.3} parent=79 // loop_header_branch
                %195 = sbr.rel (%p193) target = $region94
              $region91: #{reverse.3} parent=79 // loop_body
                %v199 = vld [vmem:[%s197] sm:$0xf]
                %200 = vst [vmem:[%s198] sm:$0xf] %v199
                %v201 = vld [vmem:[%s197 + $0x4] sm:$0xf]
                %202 = vst [vmem:[%s198 + $0x40] sm:$0xf] %v201
              $region92: #{reverse.3} parent=79 // loop_footer
                %s196 = sadd.s32 1, %s192
              $region93: #{reverse.3} parent=79 // loop_footer_branch
                %191 = sbr.rel target = $region89
              $region94: #{reverse.3} parent=79 // loop_exit
                _
            $region80: #{reverse.3} parent=64 // pred_fallthru
              _
          $region65: #{reverse.3} parent=60 // pred_fallthru
            _
          // Predicated region
          $region66: #{reverse.3} parent=60 // pred_check
            _
          $region67: #{reverse.3} parent=60 // pred_check_branch
            %166 = sbr.rel (0) target = $region69
          $region68: #{reverse.3} parent=60 // pred_region
            loop: start=0, step=1, limit=1
            $region70: #{reverse.3} parent=68 // loop_pre_header
              _
            $region71: #{reverse.3} parent=68 // loop_header
              %s169 = sphi 0, %s173
              %p170 = scmp.ge.s32.totalorder %s169, 1
              %s174 = sphi %s153, %s153
              %s175 = sphi %s160, %s160
            $region72: #{reverse.3} parent=68 // loop_header_branch
              %172 = sbr.rel (%p170) target = $region76
            $region73: #{reverse.3} parent=68 // loop_body
              %v176 = vld [vmem:[%s174] sm:$0xf]
              %177 = vst [vmem:[%s175] sm:$0xf] %v176
              %v178 = vld [vmem:[%s174 + $0x4] sm:$0xf]
              %179 = vst [vmem:[%s175 + $0x40] sm:$0xf] %v178
            $region74: #{reverse.3} parent=68 // loop_footer
              %s173 = sadd.s32 1, %s169
            $region75: #{reverse.3} parent=68 // loop_footer_branch
              %168 = sbr.rel target = $region71
            $region76: #{reverse.3} parent=68 // loop_exit
              _
          $region69: #{reverse.3} parent=60 // pred_fallthru
            _
        $region61: #{reverse.3} parent=56 // pred_fallthru
          _
        %203 = vnop
      $region57: #{reverse.3} parent=5 // pred_fallthru
        _
      %p204 = scmp.le.s32.totalorder 2, %s6
      // Predicated region
      $region95: #{reverse.3} parent=5 // pred_check
        %p205 = pneg %p204
      $region96: #{reverse.3} parent=5 // pred_check_branch
        %207 = sbr.rel (%p205) target = $region98
      $region97: #{reverse.3} parent=5 // pred_region
        %s208 = ssub.s32 %s6, 2
        %s209 = sand.u32 %s12, 1
        %s210 = sand.u32 %s12, 1
        %s211 = smul.addr %s210, 8
        %s212 = scalar_lea.vmem [#allocation3], %s211
      $region98: #{reverse.3} parent=5 // pred_fallthru
        _
    $region6: #{reverse.3} parent=1 // loop_footer
      %s10 = sadd.s32 1, %s6
    $region7: #{reverse.3} parent=1 // loop_footer_branch
      %5 = sbr.rel target = $region3
    $region8: #{reverse.3} parent=1 // loop_exit
      _

// kernel: a_call__.1
$region0: #{a_call__.1}
  #allocation0 [shape = 'u32[]', space=smem, size = 0x4, offset = 0x4, fixed_abs, tag = 'smem constant byte address 0x4 - core index']
  #allocation1 [shape = 'u32[144,128]{1,0:T(1,128)}', space=vmem, size = 0x12000, scoped, tag = 'internal scratch']
  %s0 = inlined_call_operand.vmem [shape: f32[2,2,2048], index: 0, kind: input, shape index: {}]
  %s1 = inlined_call_operand.vmem [shape: f32[2,4,2048], index: 1, kind: input, shape index: {}]
  %s2 = inlined_call_operand.vmem [shape: f32[2,2,4,2048], index: 2, kind: output, shape index: {}]
  %s3 = sld [smem:[#allocation0]]
  $region41: #{a_call__.1} parent=0
    _
  %s5 = ssub.s32 1, %s3
  %s6 = scalar_select 0, %s5, %s3
  loop: start=0, step=1, limit=4
  $region2: #{a_call__.1} parent=0 // loop_pre_header
    _
  $region3: #{a_call__.1} parent=0 // loop_header
    %s8 = sphi 0, %s12
    %p9 = scmp.ge.s32.totalorder %s8, 4
    %s15 = sphi 0, %s27
    %s16 = sphi 0, %s23
    %s17 = sphi 0, %s15
    %s18 = sphi 0, %s16
    %s19 = sphi 0, %s17
    %s20 = sphi 0, %s18
    %s32 = sphi 0, %s34
    %s35 = sphi 0, %s32
    %s36 = sphi 0, %s35
    %s52 = sphi 0, %s36
    %s58 = sphi 0, %s60
    %s61 = sphi 0, %s58
    %s62 = sphi 0, %s61
    %s78 = sphi 0, %s62
    %s86 = sphi 0, %s88
    %s89 = sphi 0, %s86
    %s90 = sphi 0, %s89
    %s106 = sphi 0, %s90
  $region4: #{a_call__.1} parent=0 // loop_header_branch
    %11 = sbr.rel (%p9) target = $region8
  $region5: #{a_call__.1} parent=0 // loop_body
    %s13 = ssub.s32 %s8, 1
    %s14 = ssub.s32 %s8, 2
    %s21 = sadd.s32 1, %s16
    %p22 = scmp.ge.s32.totalorder %s21, 2
    %s23 = scalar_select %p22, 0, %s21
    %s24 = sadd.s32 1, %s15
    %s25 = scalar_select %p22, %s24, %s15
    %p26 = scmp.ge.s32.totalorder %s25, 1
    %s27 = scalar_select %p26, 0, %s25
    %s28 = ssub.s32 %s16, %s23
    %s29 = ssub.s32 %s15, %s27
    %s30 = sor.u32 %s28, %s29
    %p31 = scmp.eq.s32.totalorder %s30, 0
    %s33 = sadd.s32 %s32, 1
    %s34 = scalar_select %p31, %s32, %s33
    %p37 = pneg %p31
    %p38 = scmp.eq.s32.totalorder %s8, 1
    %p39 = por %p37, %p38
    %p40 = scmp.ne.s32.totalorder %s32, %s35
    %p41 = scmp.eq.s32.totalorder %s8, 0
    %p42 = por %p40, %p41
    %p43 = scmp.ne.s32.totalorder %s32, %s35
    %p44 = scmp.eq.s32.totalorder %s13, 1
    %p45 = por %p43, %p44
    %p46 = scmp.ne.s32.totalorder %s35, %s36
    %p47 = scmp.eq.s32.totalorder %s13, 0
    %p48 = por %p46, %p47
    %p49 = scmp.ne.s32.totalorder %s35, %s36
    %p50 = scmp.eq.s32.totalorder %s14, 1
    %p51 = por %p49, %p50
    %p53 = scmp.ne.s32.totalorder %s36, %s52
    %p54 = scmp.eq.s32.totalorder %s14, 0
    %p55 = por %p53, %p54
    %s56 = ssub.s32 %s15, %s27
    %p57 = scmp.eq.s32.totalorder %s56, 0
    %s59 = sadd.s32 %s58, 1
    %s60 = scalar_select %p57, %s58, %s59
    %p63 = pneg %p57
    %p64 = scmp.eq.s32.totalorder %s8, 1
    %p65 = por %p63, %p64
    %p66 = scmp.ne.s32.totalorder %s58, %s61
    %p67 = scmp.eq.s32.totalorder %s8, 0
    %p68 = por %p66, %p67
    %p69 = scmp.ne.s32.totalorder %s58, %s61
    %p70 = scmp.eq.s32.totalorder %s13, 1
    %p71 = por %p69, %p70
    %p72 = scmp.ne.s32.totalorder %s61, %s62
    %p73 = scmp.eq.s32.totalorder %s13, 0
    %p74 = por %p72, %p73
    %p75 = scmp.ne.s32.totalorder %s61, %s62
    %p76 = scmp.eq.s32.totalorder %s14, 1
    %p77 = por %p75, %p76
    %p79 = scmp.ne.s32.totalorder %s62, %s78
    %p80 = scmp.eq.s32.totalorder %s14, 0
    %p81 = por %p79, %p80
    %s82 = ssub.s32 %s16, %s23
    %s83 = ssub.s32 %s15, %s27
    %s84 = sor.u32 %s82, %s83
    %p85 = scmp.eq.s32.totalorder %s84, 0
    %s87 = sadd.s32 %s86, 1
    %s88 = scalar_select %p85, %s86, %s87
    %p91 = pneg %p85
    %p92 = scmp.eq.s32.totalorder %s8, 1
    %p93 = por %p91, %p92
    %p94 = scmp.ne.s32.totalorder %s86, %s89
    %p95 = scmp.eq.s32.totalorder %s8, 0
    %p96 = por %p94, %p95
    %p97 = scmp.ne.s32.totalorder %s86, %s89
    %p98 = scmp.eq.s32.totalorder %s13, 1
    %p99 = por %p97, %p98
    %p100 = scmp.ne.s32.totalorder %s89, %s90
    %p101 = scmp.eq.s32.totalorder %s13, 0
    %p102 = por %p100, %p101
    %p103 = scmp.ne.s32.totalorder %s89, %s90
    %p104 = scmp.eq.s32.totalorder %s14, 1
    %p105 = por %p103, %p104
    %p107 = scmp.ne.s32.totalorder %s90, %s106
    %p108 = scmp.eq.s32.totalorder %s14, 0
    %p109 = por %p107, %p108
    %p110 = scmp.le.s32.totalorder 1, %s8
    %p111 = scmp.lt.s32.totalorder %s8, 3
    %p112 = pnand %p110, %p111
    %p113 = pneg %p112
    // Predicated region
    $region9: #{a_call__.1} parent=5 // pred_check
      _
    $region10: #{a_call__.1} parent=5 // pred_check_branch
      %115 = sbr.rel (%p112) target = $region12
    $region11: #{a_call__.1} parent=5 // pred_region
      %s116 = ssub.s32 %s8, 1
      // Predicated region
      $region13: #{a_call__.1} parent=11 // pred_check
        %p117 = pneg %p74
      $region14: #{a_call__.1} parent=11 // pred_check_branch
        %119 = sbr.rel (%p117) target = $region16
      $region15: #{a_call__.1} parent=11 // pred_region
        %s120 = smul.u32 16, %s17
        %p121 = scmp.lt.s32.totalorder %s120, 15
        %s122 = scalar_select %p121, %s120, 15
        %s123 = smul.addr %s122, 4
        %s124 = scalar_lea.vmem %s1, %s123
        %s125 = smul.u32 16, %s17
      $region16: #{a_call__.1} parent=11 // pred_fallthru
        _
    $region12: #{a_call__.1} parent=5 // pred_fallthru
      _
    %p126 = scmp.lt.s32.totalorder %s8, 2
    // Predicated region
    $region17: #{a_call__.1} parent=5 // pred_check
      %p127 = pneg %p126
    $region18: #{a_call__.1} parent=5 // pred_check_branch
      %129 = sbr.rel (%p127) target = $region20
    $region19: #{a_call__.1} parent=5 // pred_region
      // Predicated region
      $region21: #{a_call__.1} parent=19 // pred_check
        %p130 = pneg %p42
      $region22: #{a_call__.1} parent=19 // pred_check_branch
        %132 = sbr.rel (%p130) target = $region24
      $region23: #{a_call__.1} parent=19 // pred_region
        %s133 = smul.u32 16, %s15
        %p134 = scmp.lt.s32.totalorder %s16, 1
        %s135 = scalar_select %p134, %s16, 1
        %p136 = scmp.lt.s32.totalorder %s133, 15
        %s137 = scalar_select %p136, %s133, 15
        %s138 = smul.addr %s135, 16
        %s139 = sadd.s32 %s137, %s138
        %s140 = smul.addr %s139, 2
        %s141 = scalar_lea.vmem %s0, %s140
        %s142 = smul.u32 16, %s15
      $region24: #{a_call__.1} parent=19 // pred_fallthru
        _
    $region20: #{a_call__.1} parent=5 // pred_fallthru
      _
    %p143 = scmp.le.s32.totalorder 1, %s8
    %p144 = scmp.lt.s32.totalorder %s8, 3
    %p145 = pnand %p143, %p144
    %p146 = pneg %p145
    // Predicated region
    $region25: #{a_call__.1} parent=5 // pred_check
      _
    $region26: #{a_call__.1} parent=5 // pred_check_branch
      %148 = sbr.rel (%p145) target = $region28
    $region27: #{a_call__.1} parent=5 // pred_region
      %s149 = ssub.s32 %s8, 1
      %s150 = smul.u32 16, %s17
      %p151 = scmp.lt.s32.totalorder %s18, 1
      %s152 = scalar_select %p151, %s18, 1
      %p153 = scmp.lt.s32.totalorder %s150, 15
      %s154 = scalar_select %p153, %s150, 15
      %s155 = smul.addr %s152, 16
      %s156 = sadd.s32 %s154, %s155
      %s157 = smul.addr %s156, 2
      %s158 = scalar_lea.vmem %s0, %s157
      %p159 = pneg %p48
      %p160 = pneg %p45
      %s161 = smul.u32 16, %s17
      %p162 = scmp.lt.s32.totalorder %s161, 15
      %s163 = scalar_select %p162, %s161, 15
      %s164 = smul.addr %s163, 4
      %s165 = scalar_lea.vmem %s1, %s164
      %p166 = pneg %p74
      %p167 = pneg %p71
      %p168 = pneg %p102
      %p169 = pneg %p99
      %s170 = smul.u32 16, %s17
      %p171 = scmp.lt.s32.totalorder %s18, 1
      %s172 = scalar_select %p171, %s18, 1
      %p173 = scmp.lt.s32.totalorder %s170, 15
      %s174 = scalar_select %p173, %s170, 15
      %s175 = smul.addr %s172, 32
      %s176 = sadd.s32 %s174, %s175
      %s177 = smul.addr %s176, 4
      %s178 = scalar_lea.vmem %s2, %s177
      %s179 = smul.u32 16, %s17
      %p180 = scmp.lt.s32.totalorder %s18, 1
      %s181 = scalar_select %p180, %s18, 1
      %p182 = scmp.lt.s32.totalorder %s179, 15
      %s183 = scalar_select %p182, %s179, 15
      %s184 = smul.addr %s181, 16
      %s185 = sadd.s32 %s183, %s184
      %s186 = smul.addr %s185, 2
      %s187 = scalar_lea.vmem %s0, %s186
      %s188 = smul.u32 16, %s17
      %s189 = smul.u32 16, %s17
      %p190 = scmp.lt.s32.totalorder %s189, 15
      %s191 = scalar_select %p190, %s189, 15
      %s192 = smul.addr %s191, 4
      %s193 = scalar_lea.vmem %s1, %s192
      %s194 = smul.u32 16, %s17
      %s195 = smul.u32 16, %s17
      %p196 = scmp.lt.s32.totalorder %s18, 1
      %s197 = scalar_select %p196, %s18, 1
      %p198 = scmp.lt.s32.totalorder %s195, 15
      %s199 = scalar_select %p198, %s195, 15
      %s200 = smul.addr %s197, 32
      %s201 = sadd.s32 %s199, %s200
      %s202 = smul.addr %s201, 4
      %s203 = scalar_lea.vmem %s2, %s202
      %s204 = smul.u32 16, %s17
      %v205 = vld [vmem:[%s187] ss:$2 sm:$0xff]
      %s206 = scalar_lea.vmem %s187, 16
      %v207 = vld [vmem:[%s206] ss:$2 sm:$0xff]
      %s208 = scalar_lea.vmem %s187, 1
      %v209 = vld [vmem:[%s208] ss:$2 sm:$0xff]
      %s210 = scalar_lea.vmem %s187, 17
      %v211 = vld [vmem:[%s210] ss:$2 sm:$0xff]
      %v212 = vld [vmem:[%s193] sm:$0xff]
      %v213 = vld [vmem:[%s193 + $0x8] sm:$0xff]
      %v214 = vld [vmem:[%s193 + $0x10] sm:$0xff]
      %v215 = vld [vmem:[%s193 + $0x18] sm:$0xff]
      %v216 = vld [vmem:[%s193 + $0x20] sm:$0xff]
      %v217 = vld [vmem:[%s193 + $0x28] sm:$0xff]
      %v218 = vld [vmem:[%s193 + $0x30] sm:$0xff]
      %v219 = vld [vmem:[%s193 + $0x38] sm:$0xff]
      %s220 = scalar_lea.vmem %s193, 64
      %v221 = vld [vmem:[%s220] sm:$0xff]
      %v222 = vld [vmem:[%s220 + $0x8] sm:$0xff]
      %v223 = vld [vmem:[%s220 + $0x10] sm:$0xff]
      %v224 = vld [vmem:[%s220 + $0x18] sm:$0xff]
      %v225 = vld [vmem:[%s220 + $0x20] sm:$0xff]
      %v226 = vld [vmem:[%s220 + $0x28] sm:$0xff]
      %v227 = vld [vmem:[%s220 + $0x30] sm:$0xff]
      %v228 = vld [vmem:[%s220 + $0x38] sm:$0xff]
      %v231 = vlaneseq
      %v232 = vshrl.u32 %v231, 7
      %v233 = vsub.s32 0, %v232
      %v234 = vrot.slane %v205, %v233
      %v235 = vlaneseq
      %v236 = vshrl.u32 %v235, 7
      %v237 = vsub.s32 1, %v236
      %v238 = vrot.slane %v205, %v237
      %v239 = vlaneseq
      %v240 = vshrl.u32 %v239, 7
      %v241 = vsub.s32 2, %v240
      %v242 = vrot.slane %v205, %v241
      %v243 = vlaneseq
      %v244 = vshrl.u32 %v243, 7
      %v245 = vsub.s32 3, %v244
      %v246 = vrot.slane %v205, %v245
      %v247 = vlaneseq
      %v248 = vshrl.u32 %v247, 7
      %v249 = vsub.s32 4, %v248
      %v250 = vrot.slane %v205, %v249
      %v251 = vlaneseq
      %v252 = vshrl.u32 %v251, 7
      %v253 = vsub.s32 5, %v252
      %v254 = vrot.slane %v205, %v253
      %v255 = vlaneseq
      %v256 = vshrl.u32 %v255, 7
      %v257 = vsub.s32 6, %v256
      %v258 = vrot.slane %v205, %v257
      %v259 = vlaneseq
      %v260 = vshrl.u32 %v259, 7
      %v261 = vsub.s32 7, %v260
      %v262 = vrot.slane %v205, %v261
      %v263 = vlaneseq
      %v264 = vshrl.u32 %v263, 7
      %v265 = vsub.s32 0, %v264
      %v266 = vrot.slane %v207, %v265
      %v267 = vlaneseq
      %v268 = vshrl.u32 %v267, 7
      %v269 = vsub.s32 1, %v268
      %v270 = vrot.slane %v207, %v269
      %v271 = vlaneseq
      %v272 = vshrl.u32 %v271, 7
      %v273 = vsub.s32 2, %v272
      %v274 = vrot.slane %v207, %v273
      %v275 = vlaneseq
      %v276 = vshrl.u32 %v275, 7
      %v277 = vsub.s32 3, %v276
      %v278 = vrot.slane %v207, %v277
      %v279 = vlaneseq
      %v280 = vshrl.u32 %v279, 7
      %v281 = vsub.s32 4, %v280
      %v282 = vrot.slane %v207, %v281
      %v283 = vlaneseq
      %v284 = vshrl.u32 %v283, 7
      %v285 = vsub.s32 5, %v284
      %v286 = vrot.slane %v207, %v285
      %v287 = vlaneseq
      %v288 = vshrl.u32 %v287, 7
      %v289 = vsub.s32 6, %v288
      %v290 = vrot.slane %v207, %v289
      %v291 = vlaneseq
      %v292 = vshrl.u32 %v291, 7
      %v293 = vsub.s32 7, %v292
      %v294 = vrot.slane %v207, %v293
      %v319 = vcombine.high %v212, %v212
      %v320 = vcombine.high %v213, %v213
      %v321 = vcombine.high %v214, %v214
      %v322 = vcombine.high %v215, %v215
      %v323 = vcombine.high %v216, %v216
      %v324 = vcombine.high %v217, %v217
      %v325 = vcombine.high %v218, %v218
      %v326 = vcombine.high %v219, %v219
      %v335 = vmul.f32 %v234, %v212
      %v336 = vmul.f32 %v238, %v319
      %v337 = vmul.f32 %v242, %v213
      %v338 = vmul.f32 %v246, %v320
      %v339 = vmul.f32 %v250, %v214
      %v340 = vmul.f32 %v254, %v321
      %v341 = vmul.f32 %v258, %v215
      %v342 = vmul.f32 %v262, %v322
      %v343 = vmul.f32 %v266, %v216
      %v344 = vmul.f32 %v270, %v323
      %v345 = vmul.f32 %v274, %v217
      %v346 = vmul.f32 %v278, %v324
      %v347 = vmul.f32 %v282, %v218
      %v348 = vmul.f32 %v286, %v325
      %v349 = vmul.f32 %v290, %v219
      %v350 = vmul.f32 %v294, %v326
      %v353 = vlaneseq
      %v354 = vshrl.u32 %v353, 7
      %v355 = vsub.s32 0, %v354
      %v356 = vrot.slane %v209, %v355
      %v357 = vlaneseq
      %v358 = vshrl.u32 %v357, 7
      %v359 = vsub.s32 1, %v358
      %v360 = vrot.slane %v209, %v359
      %v361 = vlaneseq
      %v362 = vshrl.u32 %v361, 7
      %v363 = vsub.s32 2, %v362
      %v364 = vrot.slane %v209, %v363
      %v365 = vlaneseq
      %v366 = vshrl.u32 %v365, 7
      %v367 = vsub.s32 3, %v366
      %v368 = vrot.slane %v209, %v367
      %v369 = vlaneseq
      %v370 = vshrl.u32 %v369, 7
      %v371 = vsub.s32 4, %v370
      %v372 = vrot.slane %v209, %v371
      %v373 = vlaneseq
      %v374 = vshrl.u32 %v373, 7
      %v375 = vsub.s32 5, %v374
      %v376 = vrot.slane %v209, %v375
      %v377 = vlaneseq
      %v378 = vshrl.u32 %v377, 7
      %v379 = vsub.s32 6, %v378
      %v380 = vrot.slane %v209, %v379
      %v381 = vlaneseq
      %v382 = vshrl.u32 %v381, 7
      %v383 = vsub.s32 7, %v382
      %v384 = vrot.slane %v209, %v383
      %v385 = vlaneseq
      %v386 = vshrl.u32 %v385, 7
      %v387 = vsub.s32 0, %v386
      %v388 = vrot.slane %v211, %v387
      %v389 = vlaneseq
      %v390 = vshrl.u32 %v389, 7
      %v391 = vsub.s32 1, %v390
      %v392 = vrot.slane %v211, %v391
      %v393 = vlaneseq
      %v394 = vshrl.u32 %v393, 7
      %v395 = vsub.s32 2, %v394
      %v396 = vrot.slane %v211, %v395
      %v397 = vlaneseq
      %v398 = vshrl.u32 %v397, 7
      %v399 = vsub.s32 3, %v398
      %v400 = vrot.slane %v211, %v399
      %v401 = vlaneseq
      %v402 = vshrl.u32 %v401, 7
      %v403 = vsub.s32 4, %v402
      %v404 = vrot.slane %v211, %v403
      %v405 = vlaneseq
      %v406 = vshrl.u32 %v405, 7
      %v407 = vsub.s32 5, %v406
      %v408 = vrot.slane %v211, %v407
      %v409 = vlaneseq
      %v410 = vshrl.u32 %v409, 7
      %v411 = vsub.s32 6, %v410
      %v412 = vrot.slane %v211, %v411
      %v413 = vlaneseq
      %v414 = vshrl.u32 %v413, 7
      %v415 = vsub.s32 7, %v414
      %v416 = vrot.slane %v211, %v415
      %v441 = vcombine.high %v221, %v221
      %v442 = vcombine.high %v222, %v222
      %v443 = vcombine.high %v223, %v223
      %v444 = vcombine.high %v224, %v224
      %v445 = vcombine.high %v225, %v225
      %v446 = vcombine.high %v226, %v226
      %v447 = vcombine.high %v227, %v227
      %v448 = vcombine.high %v228, %v228
      %v457 = vmul.f32 %v356, %v221
      %v458 = vmul.f32 %v360, %v441
      %v459 = vmul.f32 %v364, %v222
      %v460 = vmul.f32 %v368, %v442
      %v461 = vmul.f32 %v372, %v223
      %v462 = vmul.f32 %v376, %v443
      %v463 = vmul.f32 %v380, %v224
      %v464 = vmul.f32 %v384, %v444
      %v465 = vmul.f32 %v388, %v225
      %v466 = vmul.f32 %v392, %v445
      %v467 = vmul.f32 %v396, %v226
      %v468 = vmul.f32 %v400, %v446
      %v469 = vmul.f32 %v404, %v227
      %v470 = vmul.f32 %v408, %v447
      %v471 = vmul.f32 %v412, %v228
      %v472 = vmul.f32 %v416, %v448
      %v473 = vsub.f32 %v335, %v457
      %v474 = vsub.f32 %v336, %v458
      %v475 = vsub.f32 %v337, %v459
      %v476 = vsub.f32 %v338, %v460
      %v477 = vsub.f32 %v339, %v461
      %v478 = vsub.f32 %v340, %v462
      %v479 = vsub.f32 %v341, %v463
      %v480 = vsub.f32 %v342, %v464
      %v481 = vsub.f32 %v343, %v465
      %v482 = vsub.f32 %v344, %v466
      %v483 = vsub.f32 %v345, %v467
      %v484 = vsub.f32 %v346, %v468
      %v485 = vsub.f32 %v347, %v469
      %v486 = vsub.f32 %v348, %v470
      %v487 = vsub.f32 %v349, %v471
      %v488 = vsub.f32 %v350, %v472
      %v505 = vcombine.low %v473, %v474
      %v506 = vcombine.low %v475, %v476
      %v507 = vcombine.low %v477, %v478
      %v508 = vcombine.low %v479, %v480
      %v509 = vcombine.low %v481, %v482
      %v510 = vcombine.low %v483, %v484
      %v511 = vcombine.low %v485, %v486
      %v512 = vcombine.low %v487, %v488
      %521 = vst [vmem:[%s203] sm:$0xff] %v505
      %522 = vst [vmem:[%s203 + $0x8] sm:$0xff] %v506
      %523 = vst [vmem:[%s203 + $0x10] sm:$0xff] %v507
      %524 = vst [vmem:[%s203 + $0x18] sm:$0xff] %v508
      %525 = vst [vmem:[%s203 + $0x20] sm:$0xff] %v509
      %526 = vst [vmem:[%s203 + $0x28] sm:$0xff] %v510
      %527 = vst [vmem:[%s203 + $0x30] sm:$0xff] %v511
      %528 = vst [vmem:[%s203 + $0x38] sm:$0xff] %v512
      %v529 = vmul.f32 %v234, %v221
      %v530 = vmul.f32 %v238, %v441
      %v531 = vmul.f32 %v242, %v222
      %v532 = vmul.f32 %v246, %v442
      %v533 = vmul.f32 %v250, %v223
      %v534 = vmul.f32 %v254, %v443
      %v535 = vmul.f32 %v258, %v224
      %v536 = vmul.f32 %v262, %v444
      %v537 = vmul.f32 %v266, %v225
      %v538 = vmul.f32 %v270, %v445
      %v539 = vmul.f32 %v274, %v226
      %v540 = vmul.f32 %v278, %v446
      %v541 = vmul.f32 %v282, %v227
      %v542 = vmul.f32 %v286, %v447
      %v543 = vmul.f32 %v290, %v228
      %v544 = vmul.f32 %v294, %v448
      %v545 = vmul.f32 %v356, %v212
      %v546 = vmul.f32 %v360, %v319
      %v547 = vmul.f32 %v364, %v213
      %v548 = vmul.f32 %v368, %v320
      %v549 = vmul.f32 %v372, %v214
      %v550 = vmul.f32 %v376, %v321
      %v551 = vmul.f32 %v380, %v215
      %v552 = vmul.f32 %v384, %v322
      %v553 = vmul.f32 %v388, %v216
      %v554 = vmul.f32 %v392, %v323
      %v555 = vmul.f32 %v396, %v217
      %v556 = vmul.f32 %v400, %v324
      %v557 = vmul.f32 %v404, %v218
      %v558 = vmul.f32 %v408, %v325
      %v559 = vmul.f32 %v412, %v219
      %v560 = vmul.f32 %v416, %v326
      %v561 = vadd.f32 %v529, %v545
      %v562 = vadd.f32 %v530, %v546
      %v563 = vadd.f32 %v531, %v547
      %v564 = vadd.f32 %v532, %v548
      %v565 = vadd.f32 %v533, %v549
      %v566 = vadd.f32 %v534, %v550
      %v567 = vadd.f32 %v535, %v551
      %v568 = vadd.f32 %v536, %v552
      %v569 = vadd.f32 %v537, %v553
      %v570 = vadd.f32 %v538, %v554
      %v571 = vadd.f32 %v539, %v555
      %v572 = vadd.f32 %v540, %v556
      %v573 = vadd.f32 %v541, %v557
      %v574 = vadd.f32 %v542, %v558
      %v575 = vadd.f32 %v543, %v559
      %v576 = vadd.f32 %v544, %v560
      %v593 = vcombine.low %v561, %v562
      %v594 = vcombine.low %v563, %v564
      %v595 = vcombine.low %v565, %v566
      %v596 = vcombine.low %v567, %v568
      %v597 = vcombine.low %v569, %v570
      %v598 = vcombine.low %v571, %v572
      %v599 = vcombine.low %v573, %v574
      %v600 = vcombine.low %v575, %v576
      %s609 = scalar_lea.vmem %s203, 64
      %610 = vst [vmem:[%s609] sm:$0xff] %v593
      %611 = vst [vmem:[%s609 + $0x8] sm:$0xff] %v594
      %612 = vst [vmem:[%s609 + $0x10] sm:$0xff] %v595
      %613 = vst [vmem:[%s609 + $0x18] sm:$0xff] %v596
      %614 = vst [vmem:[%s609 + $0x20] sm:$0xff] %v597
      %615 = vst [vmem:[%s609 + $0x28] sm:$0xff] %v598
      %616 = vst [vmem:[%s609 + $0x30] sm:$0xff] %v599
      %617 = vst [vmem:[%s609 + $0x38] sm:$0xff] %v600
      %s618 = smul.u32 16, %s17
      %p619 = scmp.lt.s32.totalorder %s18, 1
      %s620 = scalar_select %p619, %s18, 1
      %p621 = scmp.lt.s32.totalorder %s618, 15
      %s622 = scalar_select %p621, %s618, 15
      %s623 = smul.addr %s620, 32
      %s624 = sadd.s32 %s622, %s623
      %s625 = smul.addr %s624, 4
      %s626 = scalar_lea.vmem %s2, %s625
      // Predicated region
      $region29: #{a_call__.1} parent=27 // pred_check
        %p627 = pneg %p99
      $region30: #{a_call__.1} parent=27 // pred_check_branch
        %629 = sbr.rel (%p627) target = $region32
      $region31: #{a_call__.1} parent=27 // pred_region
        %s630 = smul.u32 16, %s17
      $region32: #{a_call__.1} parent=27 // pred_fallthru
        _
    $region28: #{a_call__.1} parent=5 // pred_fallthru
      _
    %p631 = scmp.le.s32.totalorder 2, %s8
    // Predicated region
    $region33: #{a_call__.1} parent=5 // pred_check
      %p632 = pneg %p631
    $region34: #{a_call__.1} parent=5 // pred_check_branch
      %634 = sbr.rel (%p632) target = $region36
    $region35: #{a_call__.1} parent=5 // pred_region
      %s635 = ssub.s32 %s8, 2
      // Predicated region
      $region37: #{a_call__.1} parent=35 // pred_check
        %p636 = pneg %p105
      $region38: #{a_call__.1} parent=35 // pred_check_branch
        %638 = sbr.rel (%p636) target = $region40
      $region39: #{a_call__.1} parent=35 // pred_region
        %s639 = smul.u32 16, %s19
        %p640 = scmp.lt.s32.totalorder %s20, 1
        %s641 = scalar_select %p640, %s20, 1
        %p642 = scmp.lt.s32.totalorder %s639, 15
        %s643 = scalar_select %p642, %s639, 15
        %s644 = smul.addr %s641, 32
        %s645 = sadd.s32 %s643, %s644
        %s646 = smul.addr %s645, 4
        %s647 = scalar_lea.vmem %s2, %s646
      $region40: #{a_call__.1} parent=35 // pred_fallthru
        _
    $region36: #{a_call__.1} parent=5 // pred_fallthru
      _
  $region6: #{a_call__.1} parent=0 // loop_footer
    %s12 = sadd.s32 1, %s8
  $region7: #{a_call__.1} parent=0 // loop_footer_branch
    %7 = sbr.rel target = $region3
  $region8: #{a_call__.1} parent=0 // loop_exit
    _

</llo_original>
